<compile_context>
chip_gen: v7x
topology: tpu7x:2x2x1
jax: 0.10.0
libtpu: 0.0.40
codegen_flags: <defaults>
</compile_context>

<pallas_src>
import functools
from math import prod

import jax
import jax.numpy as jnp
import numpy as np
from jax.experimental import pallas as pl
from jax.experimental.pallas import tpu as pltpu

_LANES = 128
_SUBLANES = 8


def _paired_noise_kernel(x_ref, noise_ref, o_ref, *, sigma):
    """x_ref/o_ref: (P, r_tile, 128) VMEM; noise_ref: (1, r_tile, 128) f32."""
    # factor = 1 + sigma*noise is computed once on the shared (1, r, 128)
    # noise row; the only full-width (P, r, 128) VPU op is a single multiply
    # (vs. mul+mul+add in the naive x + noise*(sigma*x) form).
    factor = 1.0 + sigma * noise_ref[...]                 # f32 broadcast row
    o_ref[...] = x_ref[...] * factor.astype(o_ref.dtype)  # broadcast over P


def paired_gaussian_noise(x, sigma, key, *, pair_dim=0, training=True):
    """JAX/Pallas equivalent of PairedGaussianNoise.forward."""
    if (not training) or sigma == 0:
        return x

    # --- glue: move pair_dim to front, flatten + pad to a lane-dense view ---
    x_m = jnp.moveaxis(x, pair_dim, 0)                    # no-op for pair_dim == 0
    orig_shape = x_m.shape
    P = orig_shape[0]
    F = int(prod(orig_shape[1:]))

    # Pad the feature axis up to a multiple of 8*128 so the (R, 128) view has
    # R % 8 == 0: every block is a clean (8,128) multiple, no masked stores,
    # and no "single giant fallback tile" path.
    chunk = _SUBLANES * _LANES
    F_pad = ((F + chunk - 1) // chunk) * chunk
    R = F_pad // _LANES

    x2 = x_m.reshape(P, F)
    if F_pad != F:
        x2 = jnp.pad(x2, ((0, 0), (0, F_pad - F)))
    x3 = x2.reshape(P, R, _LANES)

    # Shared noise row: one standard normal per feature, broadcast across P.
    # TODO(synk): on real TPU this could be generated in-kernel with
    # pltpu.prng_seed/prng_random_bits (saving one HBM pass over the noise
    # slab), but those primitives have no interpret-mode lowering, so the draw
    # stays in plain JAX and the kernel fuses the broadcast scale + add.
    noise = jax.random.normal(key, (1, R, _LANES), dtype=jnp.float32)

    # Row-tile size: target ~2 MiB of x per block so per-grid-step overhead is
    # amortized, while in/out/noise double-buffered stays well under the
    # scoped-VMEM defaults on v5e/v6e/v7x (~10 MiB worst case).
    itemsize = jnp.dtype(x.dtype).itemsize
    row_bytes = P * _LANES * itemsize
    r_cap = max(_SUBLANES,
                ((2 * 1024 * 1024) // row_bytes) // _SUBLANES * _SUBLANES)
    r_tile = min(R, r_cap)
    grid = (pl.cdiv(R, r_tile),)

    kernel = functools.partial(_paired_noise_kernel, sigma=float(sigma))
    out3 = pl.pallas_call(
        kernel,
        out_shape=jax.ShapeDtypeStruct((P, R, _LANES), x.dtype),
        grid=grid,
        in_specs=[
            pl.BlockSpec((P, r_tile, _LANES), lambda i: (0, i, 0)),  # x tile
            pl.BlockSpec((1, r_tile, _LANES), lambda i: (0, i, 0)),  # noise
        ],
        out_specs=pl.BlockSpec((P, r_tile, _LANES), lambda i: (0, i, 0)),
        compiler_params=pltpu.CompilerParams(
            # Tiles are fully independent -> shard across both TCs on v7x.
            dimension_semantics=("parallel",),
        ),
    )(x3, noise)

    # --- glue: restore original layout ---
    out2 = out3.reshape(P, F_pad)
    if F_pad != F:
        out2 = out2[:, :F]
    return jnp.moveaxis(out2.reshape(orig_shape), 0, pair_dim)


if __name__ == "__main__":
    root = jax.random.PRNGKey(0)
    kx, kn = jax.random.split(root)
    # (pair, C, H, W) with pair_dim = 0, like the torch module default.
    x = jax.random.normal(kx, (2, 4, 16, 16), dtype=jnp.float32)

    sigma = 0.1
    out = paired_gaussian_noise(x, sigma, kn, pair_dim=0, training=True)
    out = jax.block_until_ready(out)

    assert out.shape == x.shape and out.dtype == x.dtype

    xn = np.asarray(x)
    on = np.asarray(out)

    # Paired property: the additive term is n * sigma * x with the SAME n
    # across the pair dimension, so (out0 - x0) * x1 == (out1 - x1) * x0.
    d0 = (on[0] - xn[0]) * xn[1]
    d1 = (on[1] - xn[1]) * xn[0]
    np.testing.assert_allclose(d0, d1, rtol=1e-4, atol=1e-5)

    # Recover the shared noise where x is comfortably nonzero and sanity-check
    # it looks standard normal.
    n_hat = (on[0] / xn[0] - 1.0) / sigma
    mask = np.abs(xn[0]) > 0.1
    assert abs(n_hat[mask].mean()) < 0.2
    assert 0.7 < n_hat[mask].std() < 1.3

    # Eval mode (and sigma == 0) is the identity.
    out_eval = paired_gaussian_noise(x, sigma, kn, training=False)
    np.testing.assert_array_equal(np.asarray(out_eval), xn)

    print("KERNEL_OK")
</pallas_src>

<mosaic_0001>
module attributes {stable_mosaic.version = 11 : i64} {
  func.func @_paired_noise_kernel(%arg0: i32, %arg1: memref<2x8x128xf32, #tpu.memory_space<vmem>>, %arg2: memref<1x8x128xf32, #tpu.memory_space<vmem>>, %arg3: memref<2x8x128xf32, #tpu.memory_space<vmem>>) attributes {dimension_semantics = [#tpu.dimension_semantics<parallel>], iteration_bounds = array<i64: 1>, scalar_prefetch = 0 : i64, scratch_operands = 0 : i64, tpu.core_type = #tpu.core_type<tc>, window_params = [{transform_indices = @transform_0, window_bounds = array<i64: 2, 8, 128>}, {transform_indices = @transform_1, window_bounds = array<i64: 1, 8, 128>}, {transform_indices = @transform_2, window_bounds = array<i64: 2, 8, 128>}]} {
    %c0 = arith.constant 0 : index
    %c0_0 = arith.constant 0 : index
    %c0_1 = arith.constant 0 : index
    %0 = vector.load %arg2[%c0, %c0_0, %c0_1] : memref<1x8x128xf32, #tpu.memory_space<vmem>>, vector<1x8x128xf32>
    %cst = arith.constant 1.000000e-01 : f32
    %1 = vector.broadcast %cst : f32 to vector<1x8x128xf32>
    %2 = arith.mulf %1, %0 : vector<1x8x128xf32>
    %cst_2 = arith.constant 1.000000e+00 : f32
    %3 = vector.broadcast %cst_2 : f32 to vector<1x8x128xf32>
    %4 = arith.addf %3, %2 : vector<1x8x128xf32>
    %c0_3 = arith.constant 0 : index
    %c0_4 = arith.constant 0 : index
    %c0_5 = arith.constant 0 : index
    %5 = vector.load %arg1[%c0_3, %c0_4, %c0_5] : memref<2x8x128xf32, #tpu.memory_space<vmem>>, vector<2x8x128xf32>
    %6 = vector.broadcast %4 : vector<1x8x128xf32> to vector<2x8x128xf32>
    %7 = arith.mulf %5, %6 : vector<2x8x128xf32>
    %c0_6 = arith.constant 0 : index
    %c0_7 = arith.constant 0 : index
    %c0_8 = arith.constant 0 : index
    %8 = vector.load %arg3[%c0_6, %c0_7, %c0_8] : memref<2x8x128xf32, #tpu.memory_space<vmem>>, vector<2x8x128xf32>
    tpu.vector_store %arg3[%c0_6, %c0_7, %c0_8], %7 {strides = array<i32>} : memref<2x8x128xf32, #tpu.memory_space<vmem>>, vector<2x8x128xf32>,
    return
  }
  func.func @transform_0(%arg0: i32) -> (i32, i32, i32) {
    %c0_i32 = arith.constant 0 : i32
    %c0_i32_0 = arith.constant 0 : i32
    %c0_i32_1 = arith.constant 0 : i32
    return %c0_i32, %arg0, %c0_i32_0 : i32, i32, i32
  }
  func.func @transform_1(%arg0: i32) -> (i32, i32, i32) {
    %c0_i32 = arith.constant 0 : i32
    %c0_i32_0 = arith.constant 0 : i32
    %c0_i32_1 = arith.constant 0 : i32
    return %c0_i32, %arg0, %c0_i32_0 : i32, i32, i32
  }
  func.func @transform_2(%arg0: i32) -> (i32, i32, i32) {
    %c0_i32 = arith.constant 0 : i32
    %c0_i32_0 = arith.constant 0 : i32
    %c0_i32_1 = arith.constant 0 : i32
    return %c0_i32, %arg0, %c0_i32_0 : i32, i32, i32
  }
}

</mosaic_0001>

<llo_original>
// kernel: tpu_custom_call.1
$region0: #{tpu_custom_call.1}
  #allocation0 [shape = 'u32[]', space=smem, size = 0x4, offset = 0x4, fixed_abs, tag = 'smem constant byte address 0x4 - core index']
  #allocation1 [shape = 'u32[144,128]{1,0:T(1,128)}', space=vmem, size = 0x12000, scoped, tag = 'internal scratch']
  %s0 = inlined_call_operand.hbm [shape: f32[2,8,128], index: 0, kind: input, shape index: {}]
  %s1 = inlined_call_operand.hbm [shape: f32[1,8,128], index: 1, kind: input, shape index: {}]
  %s2 = inlined_call_operand.hbm [shape: f32[2,8,128], index: 2, kind: output, shape index: {}]
  %s3 = sld [smem:[#allocation0]]
  $region26: #{tpu_custom_call.1} parent=0
    _
  %s5 = ssub.s32 1, %s3
  %s6 = scalar_select 0, %s5, %s3
  $region1: #{tpu_custom_call.1} parent=0
    #allocation2 [shape = 'u8[8192]{0}', space=vmem, size = 0x2000, scoped, tag = 'input window, operand 0, single buffered']
    #allocation3 [shape = 's32[1]{0}', space=sflag, size = 0x4, scoped, tag = 'scoped memory for tpu_custom_call.1']
    #allocation4 [shape = 's32[1]{0}', space=sflag, size = 0x4, scoped, tag = 'scoped memory for tpu_custom_call.1']
    #allocation5 [shape = 'u8[4096]{0}', space=vmem, size = 0x1000, scoped, tag = 'input window, operand 1, single buffered']
    #allocation6 [shape = 's32[1]{0}', space=sflag, size = 0x4, scoped, tag = 'scoped memory for tpu_custom_call.1']
    #allocation7 [shape = 'u8[8192]{0}', space=vmem, size = 0x2000, scoped, tag = 'output window, operand 0, single buffered']
    %7 = vsyncpa [#allocation3], 0
    %8 = vsyncpa [#allocation6], 0
    %9 = vsyncpa [#allocation4], 0
    // Predicated region
    $region2: #{tpu_custom_call.1} parent=1 // pred_check
      _
    $region3: #{tpu_custom_call.1} parent=1 // pred_check_branch
      %11 = sbr.rel (0) target = $region5
    $region4: #{tpu_custom_call.1} parent=1 // pred_region
      %s13 = ssub.s32 256, 256
      %14 = vsyncadd [#allocation3], %s13
      %s15 = sshll.u32 [#allocation2], 4
      %s16 = int_to_ptr.vmem [resolvable:$true] %s15
      %21 = dma.hbm_to_vmem [thread:$0]  %s0, 256, %s16, [#allocation3], 128, 128, 8
    $region5: #{tpu_custom_call.1} parent=1 // pred_fallthru
      _
    // Predicated region
    $region6: #{tpu_custom_call.1} parent=1 // pred_check
      _
    $region7: #{tpu_custom_call.1} parent=1 // pred_check_branch
      %23 = sbr.rel (0) target = $region9
    $region8: #{tpu_custom_call.1} parent=1 // pred_region
      %s25 = ssub.s32 128, 128
      %26 = vsyncadd [#allocation6], %s25
      %s28 = sshll.u32 [#allocation5], 4
      %s29 = int_to_ptr.vmem [resolvable:$true] %s28
      %31 = dma.hbm_to_vmem [thread:$0]  %s1, 128, %s29, [#allocation6]
    $region9: #{tpu_custom_call.1} parent=1 // pred_fallthru
      _
    // Predicated region
    $region10: #{tpu_custom_call.1} parent=1 // pred_check
      _
    $region11: #{tpu_custom_call.1} parent=1 // pred_check_branch
      %33 = sbr.rel (0) target = $region13
    $region12: #{tpu_custom_call.1} parent=1 // pred_region
      %34 = dma.done [#allocation3], 256
    $region13: #{tpu_custom_call.1} parent=1 // pred_fallthru
      _
    // Predicated region
    $region14: #{tpu_custom_call.1} parent=1 // pred_check
      _
    $region15: #{tpu_custom_call.1} parent=1 // pred_check_branch
      %36 = sbr.rel (0) target = $region17
    $region16: #{tpu_custom_call.1} parent=1 // pred_region
      %37 = dma.done [#allocation6], 128
    $region17: #{tpu_custom_call.1} parent=1 // pred_fallthru
      _
    %v38 = vld [vmem:[#allocation5] sm:$0xff]
    %v39 = vmul.f32 %v38, 0.1
    %v40 = vadd.f32 %v39, 1.0
    %v41 = vld [vmem:[#allocation2] sm:$0xff]
    %v42 = vld [vmem:[#allocation2 + $0x8] sm:$0xff]
    %v43 = vmul.f32 %v41, %v40
    %v44 = vmul.f32 %v42, %v40
    %45 = vst [vmem:[#allocation7] sm:$0xff] %v43
    %46 = vst [vmem:[#allocation7 + $0x8] sm:$0xff] %v44
    // Predicated region
    $region18: #{tpu_custom_call.1} parent=1 // pred_check
      _
    $region19: #{tpu_custom_call.1} parent=1 // pred_check_branch
      %48 = sbr.rel (0) target = $region21
    $region20: #{tpu_custom_call.1} parent=1 // pred_region
      %s50 = ssub.s32 256, 256
      %51 = vsyncadd [#allocation4], %s50
      %s52 = sshll.u32 [#allocation7], 4
      %s53 = int_to_ptr.vmem [resolvable:$true] %s52
      %58 = dma.vmem_to_hbm [thread:$0]  %s53, 256, %s2, [#allocation4], 128, 128, 8
    $region21: #{tpu_custom_call.1} parent=1 // pred_fallthru
      _
    // Predicated region
    $region22: #{tpu_custom_call.1} parent=1 // pred_check
      _
    $region23: #{tpu_custom_call.1} parent=1 // pred_check_branch
      %60 = sbr.rel (0) target = $region25
    $region24: #{tpu_custom_call.1} parent=1 // pred_region
      %61 = dma.done [#allocation4], 256
    $region25: #{tpu_custom_call.1} parent=1 // pred_fallthru
      _
    %62 = vsyncpa [#allocation3], 1
    %63 = vsyncpa [#allocation6], 1
    %64 = vsyncpa [#allocation4], 1

</llo_original>
